<compile_context>
chip_gen: v7x
topology: tpu7x:2x2x1
jax: 0.10.0
libtpu: 0.0.40
codegen_flags: <defaults>
</compile_context>

<pallas_src>
import functools

import jax
import jax.numpy as jnp
from jax.experimental import pallas as pl
from jax.experimental.pallas import tpu as pltpu

LANE = 128            # lanes per vreg row
SLOT = 16             # lanes reserved per packed sample (>= max feature dim 11)
PACK = LANE // SLOT   # samples packed per row = 8
SUB = 8               # sublane multiple for the packed-row (batch) dim
TB_MAX = 1024         # max packed rows per grid step (= 8192 samples)

IN_DIM = 11
N_LAYERS = 6
# Real layer dims of the PyTorch module (in, out), encoder then decoder.
LAYER_DIMS = [(11, 11), (11, 6), (6, 3), (3, 6), (6, 11), (11, 11)]
# ReLU after every layer except index 2 (encoder output) and 5 (final output).
RELU_AFTER = [True, True, False, True, True, False]


def _autoencoder_kernel(x_ref, w_ref, b_ref, o_ref):
    """Fused forward: 6 block-diagonal matmuls + bias + 4 ReLUs, all in VMEM.

    x_ref: (TB, 128) bf16 packed activations (8 samples / row, 16 lanes each)
    w_ref: (6, 128, 128) bf16 block-diagonal weights
    b_ref: (6, 1, 128) f32 tiled biases
    o_ref: (TB, 128) f32 packed outputs
    """
    h = x_ref[...]  # bf16
    for l in range(N_LAYERS):
        # bf16 x bf16 -> f32 accumulate on the MXU; bias add / ReLU in f32.
        y = jnp.dot(h, w_ref[l], preferred_element_type=jnp.float32) + b_ref[l]
        if RELU_AFTER[l]:
            y = jnp.maximum(y, 0.0)
        # Next matmul input in bf16; keep the very last layer output in f32.
        h = y.astype(jnp.bfloat16) if l + 1 < N_LAYERS else y
    o_ref[...] = h.astype(o_ref.dtype)


def init_params(key):
    """Deterministic params mimicking torch.nn.Linear default init.

    Weights are stored as (in_features, out_features) so the model computes
    x @ W + b (equivalent to PyTorch's x @ W_t.T + b).
    """
    params = []
    for (din, dout) in LAYER_DIMS:
        key, kw, kb = jax.random.split(key, 3)
        bound = 1.0 / jnp.sqrt(float(din))
        W = jax.random.uniform(kw, (din, dout), jnp.float32, -bound, bound)
        b = jax.random.uniform(kb, (dout,), jnp.float32, -bound, bound)
        params.append((W, b))
    return params


def _pack_params(params):
    """Stack params into one block-diagonal weight tensor and one bias tensor.

    Returns:
      W_all: (6, 128, 128) bf16 — 8 copies of the (padded 16x16) layer weight
             along the diagonal, zeros elsewhere.
      B_all: (6, 1, 128) f32   — layer bias padded to 16 lanes, tiled 8x.
    """
    eye = jnp.eye(PACK, dtype=jnp.float32)
    w_list, b_list = [], []
    for (W, b) in params:
        din, dout = W.shape
        Wblk = jnp.zeros((SLOT, SLOT), jnp.float32).at[:din, :dout].set(W)
        w_list.append(jnp.kron(eye, Wblk))                       # (128, 128)
        bpad = jnp.zeros((SLOT,), jnp.float32).at[:dout].set(b)
        b_list.append(jnp.tile(bpad, PACK)[None, :])             # (1, 128)
    W_all = jnp.stack(w_list).astype(jnp.bfloat16)               # (6,128,128)
    B_all = jnp.stack(b_list).astype(jnp.float32)                # (6,1,128)
    return W_all, B_all


@functools.partial(jax.jit, static_argnames=("tb_max",))
def autoencoder_forward(x, params, tb_max=TB_MAX):
    """x: (B, 11) float32 -> (B, 11) float32 (decoded)."""
    B, F = x.shape
    assert F == IN_DIM

    # Packed-row count: 8 samples per row, rounded up to the sublane multiple,
    # then to a multiple of the tile size TB.
    n_rows = pl.cdiv(B, PACK)
    n_rows = ((n_rows + SUB - 1) // SUB) * SUB
    TB = min(tb_max, n_rows)
    n_rows = ((n_rows + TB - 1) // TB) * TB
    total = n_rows * PACK

    # Pack in bf16: sample k occupies lanes [16*(k%8) : 16*(k%8)+16] of row
    # k//8.  The (total,16)->(n_rows,128) reshape is row-major layout-preserving.
    # TODO(synk): this pad is one extra (small) HBM pass outside the kernel; it
    # could be folded into the kernel with a VMEM scratch if it ever matters.
    xp = jnp.pad(x.astype(jnp.bfloat16), ((0, total - B), (0, SLOT - F)))
    xp = xp.reshape(n_rows, LANE)

    W_all, B_all = _pack_params(params)

    out_packed = pl.pallas_call(
        _autoencoder_kernel,
        out_shape=jax.ShapeDtypeStruct((n_rows, LANE), jnp.float32),
        grid=(n_rows // TB,),
        in_specs=[
            pl.BlockSpec((TB, LANE), lambda i: (i, 0)),
            pl.BlockSpec((N_LAYERS, LANE, LANE), lambda i: (0, 0, 0)),
            pl.BlockSpec((N_LAYERS, 1, LANE), lambda i: (0, 0, 0)),
        ],
        out_specs=pl.BlockSpec((TB, LANE), lambda i: (i, 0)),
        compiler_params=pltpu.CompilerParams(
            dimension_semantics=("parallel",)),
    )(xp, W_all, B_all)

    return out_packed.reshape(total, SLOT)[:B, :F]


def reference_forward(x, params):
    """Plain-JAX f32 reference of the PyTorch forward (correctness check)."""
    h = x.astype(jnp.float32)
    for (W, b), relu in zip(params, RELU_AFTER):
        h = h @ W + b
        if relu:
            h = jnp.maximum(h, 0.0)
    return h


if __name__ == "__main__":
    key = jax.random.PRNGKey(0)
    key, kx = jax.random.split(key)

    B = 20                      # small batch (not a multiple of 8 on purpose)
    x = jax.random.normal(kx, (B, IN_DIM), jnp.float32)

    params = init_params(key)

    out = autoencoder_forward(x, params)
    out = jax.block_until_ready(out)

    ref = reference_forward(x, params)
    assert out.shape == (B, IN_DIM), out.shape
    # bf16 weights/activations with f32 accumulation -> loosened tolerance.
    assert jnp.allclose(out, ref, atol=5e-2, rtol=5e-2), \
        f"max abs err {jnp.max(jnp.abs(out - ref))}"

    print("KERNEL_OK")
</pallas_src>

<mosaic_0001>
module attributes {stable_mosaic.version = 11 : i64} {
  func.func @_autoencoder_kernel(%arg0: i32, %arg1: memref<8x128xbf16, #tpu.memory_space<vmem>>, %arg2: memref<6x128x128xbf16, #tpu.memory_space<vmem>>, %arg3: memref<6x1x128xf32, #tpu.memory_space<vmem>>, %arg4: memref<8x128xf32, #tpu.memory_space<vmem>>) attributes {dimension_semantics = [#tpu.dimension_semantics<parallel>], iteration_bounds = array<i64: 1>, scalar_prefetch = 0 : i64, scratch_operands = 0 : i64, tpu.core_type = #tpu.core_type<tc>, window_params = [{transform_indices = @transform_0, window_bounds = array<i64: 8, 128>}, {pipeline_mode = #tpu.pipeline_mode<synchronous>, transform_indices = @transform_1, window_bounds = array<i64: 6, 128, 128>}, {pipeline_mode = #tpu.pipeline_mode<synchronous>, transform_indices = @transform_2, window_bounds = array<i64: 6, 1, 128>}, {transform_indices = @transform_3, window_bounds = array<i64: 8, 128>}]} {
    %c0 = arith.constant 0 : index
    %c0_0 = arith.constant 0 : index
    %0 = vector.load %arg1[%c0, %c0_0] : memref<8x128xbf16, #tpu.memory_space<vmem>>, vector<8x128xbf16>
    %c0_1 = arith.constant 0 : index
    %c0_2 = arith.constant 0 : index
    %c0_3 = arith.constant 0 : index
    %1 = vector.load %arg2[%c0_1, %c0_2, %c0_3] : memref<6x128x128xbf16, #tpu.memory_space<vmem>>, vector<1x128x128xbf16>
    %2 = vector.shape_cast %1 : vector<1x128x128xbf16> to vector<128x128xbf16>
    %cst = arith.constant dense<0.000000e+00> : vector<8x128xf32>
    %3 = tpu.matmul %0, %2, %cst {dimension_numbers = #tpu.dot_dimension_numbers<[1], [0], [0], [1], [0, 0, 1, 1], [], []>} : vector<8x128xbf16>, vector<128x128xbf16>, vector<8x128xf32> -> vector<8x128xf32>
    %c0_4 = arith.constant 0 : index
    %c0_5 = arith.constant 0 : index
    %c0_6 = arith.constant 0 : index
    %4 = vector.load %arg3[%c0_4, %c0_5, %c0_6] : memref<6x1x128xf32, #tpu.memory_space<vmem>>, vector<1x1x128xf32>
    %5 = vector.shape_cast %4 : vector<1x1x128xf32> to vector<1x128xf32>
    %6 = vector.broadcast %5 : vector<1x128xf32> to vector<8x128xf32>
    %7 = arith.addf %3, %6 : vector<8x128xf32>
    %cst_7 = arith.constant 0.000000e+00 : f32
    %8 = vector.broadcast %cst_7 : f32 to vector<8x128xf32>
    %9 = arith.maximumf %7, %8 : vector<8x128xf32>
    %10 = arith.truncf %9 : vector<8x128xf32> to vector<8x128xbf16>
    %c1 = arith.constant 1 : index
    %c0_8 = arith.constant 0 : index
    %c0_9 = arith.constant 0 : index
    %11 = vector.load %arg2[%c1, %c0_8, %c0_9] : memref<6x128x128xbf16, #tpu.memory_space<vmem>>, vector<1x128x128xbf16>
    %12 = vector.shape_cast %11 : vector<1x128x128xbf16> to vector<128x128xbf16>
    %cst_10 = arith.constant dense<0.000000e+00> : vector<8x128xf32>
    %13 = tpu.matmul %10, %12, %cst_10 {dimension_numbers = #tpu.dot_dimension_numbers<[1], [0], [0], [1], [0, 0, 1, 1], [], []>} : vector<8x128xbf16>, vector<128x128xbf16>, vector<8x128xf32> -> vector<8x128xf32>
    %c1_11 = arith.constant 1 : index
    %c0_12 = arith.constant 0 : index
    %c0_13 = arith.constant 0 : index
    %14 = vector.load %arg3[%c1_11, %c0_12, %c0_13] : memref<6x1x128xf32, #tpu.memory_space<vmem>>, vector<1x1x128xf32>
    %15 = vector.shape_cast %14 : vector<1x1x128xf32> to vector<1x128xf32>
    %16 = vector.broadcast %15 : vector<1x128xf32> to vector<8x128xf32>
    %17 = arith.addf %13, %16 : vector<8x128xf32>
    %cst_14 = arith.constant 0.000000e+00 : f32
    %18 = vector.broadcast %cst_14 : f32 to vector<8x128xf32>
    %19 = arith.maximumf %17, %18 : vector<8x128xf32>
    %20 = arith.truncf %19 : vector<8x128xf32> to vector<8x128xbf16>
    %c2 = arith.constant 2 : index
    %c0_15 = arith.constant 0 : index
    %c0_16 = arith.constant 0 : index
    %21 = vector.load %arg2[%c2, %c0_15, %c0_16] : memref<6x128x128xbf16, #tpu.memory_space<vmem>>, vector<1x128x128xbf16>
    %22 = vector.shape_cast %21 : vector<1x128x128xbf16> to vector<128x128xbf16>
    %cst_17 = arith.constant dense<0.000000e+00> : vector<8x128xf32>
    %23 = tpu.matmul %20, %22, %cst_17 {dimension_numbers = #tpu.dot_dimension_numbers<[1], [0], [0], [1], [0, 0, 1, 1], [], []>} : vector<8x128xbf16>, vector<128x128xbf16>, vector<8x128xf32> -> vector<8x128xf32>
    %c2_18 = arith.constant 2 : index
    %c0_19 = arith.constant 0 : index
    %c0_20 = arith.constant 0 : index
    %24 = vector.load %arg3[%c2_18, %c0_19, %c0_20] : memref<6x1x128xf32, #tpu.memory_space<vmem>>, vector<1x1x128xf32>
    %25 = vector.shape_cast %24 : vector<1x1x128xf32> to vector<1x128xf32>
    %26 = vector.broadcast %25 : vector<1x128xf32> to vector<8x128xf32>
    %27 = arith.addf %23, %26 : vector<8x128xf32>
    %28 = arith.truncf %27 : vector<8x128xf32> to vector<8x128xbf16>
    %c3 = arith.constant 3 : index
    %c0_21 = arith.constant 0 : index
    %c0_22 = arith.constant 0 : index
    %29 = vector.load %arg2[%c3, %c0_21, %c0_22] : memref<6x128x128xbf16, #tpu.memory_space<vmem>>, vector<1x128x128xbf16>
    %30 = vector.shape_cast %29 : vector<1x128x128xbf16> to vector<128x128xbf16>
    %cst_23 = arith.constant dense<0.000000e+00> : vector<8x128xf32>
    %31 = tpu.matmul %28, %30, %cst_23 {dimension_numbers = #tpu.dot_dimension_numbers<[1], [0], [0], [1], [0, 0, 1, 1], [], []>} : vector<8x128xbf16>, vector<128x128xbf16>, vector<8x128xf32> -> vector<8x128xf32>
    %c3_24 = arith.constant 3 : index
    %c0_25 = arith.constant 0 : index
    %c0_26 = arith.constant 0 : index
    %32 = vector.load %arg3[%c3_24, %c0_25, %c0_26] : memref<6x1x128xf32, #tpu.memory_space<vmem>>, vector<1x1x128xf32>
    %33 = vector.shape_cast %32 : vector<1x1x128xf32> to vector<1x128xf32>
    %34 = vector.broadcast %33 : vector<1x128xf32> to vector<8x128xf32>
    %35 = arith.addf %31, %34 : vector<8x128xf32>
    %cst_27 = arith.constant 0.000000e+00 : f32
    %36 = vector.broadcast %cst_27 : f32 to vector<8x128xf32>
    %37 = arith.maximumf %35, %36 : vector<8x128xf32>
    %38 = arith.truncf %37 : vector<8x128xf32> to vector<8x128xbf16>
    %c4 = arith.constant 4 : index
    %c0_28 = arith.constant 0 : index
    %c0_29 = arith.constant 0 : index
    %39 = vector.load %arg2[%c4, %c0_28, %c0_29] : memref<6x128x128xbf16, #tpu.memory_space<vmem>>, vector<1x128x128xbf16>
    %40 = vector.shape_cast %39 : vector<1x128x128xbf16> to vector<128x128xbf16>
    %cst_30 = arith.constant dense<0.000000e+00> : vector<8x128xf32>
    %41 = tpu.matmul %38, %40, %cst_30 {dimension_numbers = #tpu.dot_dimension_numbers<[1], [0], [0], [1], [0, 0, 1, 1], [], []>} : vector<8x128xbf16>, vector<128x128xbf16>, vector<8x128xf32> -> vector<8x128xf32>
    %c4_31 = arith.constant 4 : index
    %c0_32 = arith.constant 0 : index
    %c0_33 = arith.constant 0 : index
    %42 = vector.load %arg3[%c4_31, %c0_32, %c0_33] : memref<6x1x128xf32, #tpu.memory_space<vmem>>, vector<1x1x128xf32>
    %43 = vector.shape_cast %42 : vector<1x1x128xf32> to vector<1x128xf32>
    %44 = vector.broadcast %43 : vector<1x128xf32> to vector<8x128xf32>
    %45 = arith.addf %41, %44 : vector<8x128xf32>
    %cst_34 = arith.constant 0.000000e+00 : f32
    %46 = vector.broadcast %cst_34 : f32 to vector<8x128xf32>
    %47 = arith.maximumf %45, %46 : vector<8x128xf32>
    %48 = arith.truncf %47 : vector<8x128xf32> to vector<8x128xbf16>
    %c5 = arith.constant 5 : index
    %c0_35 = arith.constant 0 : index
    %c0_36 = arith.constant 0 : index
    %49 = vector.load %arg2[%c5, %c0_35, %c0_36] : memref<6x128x128xbf16, #tpu.memory_space<vmem>>, vector<1x128x128xbf16>
    %50 = vector.shape_cast %49 : vector<1x128x128xbf16> to vector<128x128xbf16>
    %cst_37 = arith.constant dense<0.000000e+00> : vector<8x128xf32>
    %51 = tpu.matmul %48, %50, %cst_37 {dimension_numbers = #tpu.dot_dimension_numbers<[1], [0], [0], [1], [0, 0, 1, 1], [], []>} : vector<8x128xbf16>, vector<128x128xbf16>, vector<8x128xf32> -> vector<8x128xf32>
    %c5_38 = arith.constant 5 : index
    %c0_39 = arith.constant 0 : index
    %c0_40 = arith.constant 0 : index
    %52 = vector.load %arg3[%c5_38, %c0_39, %c0_40] : memref<6x1x128xf32, #tpu.memory_space<vmem>>, vector<1x1x128xf32>
    %53 = vector.shape_cast %52 : vector<1x1x128xf32> to vector<1x128xf32>
    %54 = vector.broadcast %53 : vector<1x128xf32> to vector<8x128xf32>
    %55 = arith.addf %51, %54 : vector<8x128xf32>
    %c0_41 = arith.constant 0 : index
    %c0_42 = arith.constant 0 : index
    %56 = vector.load %arg4[%c0_41, %c0_42] : memref<8x128xf32, #tpu.memory_space<vmem>>, vector<8x128xf32>
    tpu.vector_store %arg4[%c0_41, %c0_42], %55 {strides = array<i32>} : memref<8x128xf32, #tpu.memory_space<vmem>>, vector<8x128xf32>,
    return
  }
  func.func @transform_0(%arg0: i32) -> (i32, i32) {
    %c0_i32 = arith.constant 0 : i32
    %c0_i32_0 = arith.constant 0 : i32
    return %arg0, %c0_i32 : i32, i32
  }
  func.func @transform_1(%arg0: i32) -> (i32, i32, i32) {
    %c0_i32 = arith.constant 0 : i32
    %c0_i32_0 = arith.constant 0 : i32
    %c0_i32_1 = arith.constant 0 : i32
    %c0_i32_2 = arith.constant 0 : i32
    return %c0_i32, %c0_i32_0, %c0_i32_1 : i32, i32, i32
  }
  func.func @transform_2(%arg0: i32) -> (i32, i32, i32) {
    %c0_i32 = arith.constant 0 : i32
    %c0_i32_0 = arith.constant 0 : i32
    %c0_i32_1 = arith.constant 0 : i32
    %c0_i32_2 = arith.constant 0 : i32
    return %c0_i32, %c0_i32_0, %c0_i32_1 : i32, i32, i32
  }
  func.func @transform_3(%arg0: i32) -> (i32, i32) {
    %c0_i32 = arith.constant 0 : i32
    %c0_i32_0 = arith.constant 0 : i32
    return %arg0, %c0_i32 : i32, i32
  }
}

</mosaic_0001>

<llo_original>
// kernel: tile.33
$region0: #{tile.33}
  #allocation0 [shape = 's32[1]{0}', space=sflag, size = 0x4, scoped, tag = 'scoped memory for tile.33']
  %s0 = inlined_call_operand.vmem [shape: f32[16], index: 0, kind: input, shape index: {}]
  %s1 = inlined_call_operand.vmem [shape: f32[8,16], index: 1, kind: output, shape index: {}]
  // Predicated region
  $region2: #{tile.33} parent=0 // pred_check
    _
  $region3: #{tile.33} parent=0 // pred_check_branch
    %3 = sbr.rel (0) target = $region5
  $region4: #{tile.33} parent=0 // pred_region
    _
  $region5: #{tile.33} parent=0 // pred_fallthru
    _
  %v4 = vld [vmem:[%s0] ss:$0 sm:$0xff]
  %5 = vst [vmem:[%s1] sm:$0xff] %v4

// kernel: tile.54
$region0: #{tile.54}
  %s0 = inlined_call_operand.vmem [shape: f32[8,16], index: 0, kind: input, shape index: {}]
  %s1 = inlined_call_operand.vmem [shape: f32[1,1,128], index: 1, kind: output, shape index: {}]
  $region1: #{tile.54} parent=0
    #allocation0 [shape = 'u8[4096]{0}', space=vmem, size = 0x1000, scoped, tag = 'scoped mem for output reshape']
    %v2 = vld [vmem:[%s0] sm:$0x1]
    %vm3 = vcmask 130048
    %4 = vst.msk [vmem:[#allocation0] sm:$0x1] %vm3, %v2
    %s5 = scalar_lea.vmem %s0, 7
    %v6 = vld [vmem:[%s5] sm:$0x1]
    %7 = vrot.lane.b32.xlu0 %v6, 112
    %v8 = vpop.permute.xlu0 %7
    %vm9 = vcmask 1048448
    %10 = vst.msk [vmem:[#allocation0] sm:$0x1] %vm9, %v8
    %s11 = scalar_lea.vmem %s0, 6
    %v12 = vld [vmem:[%s11] sm:$0x1]
    %13 = vrot.lane.b32.xlu0 %v12, 96
    %v14 = vpop.permute.xlu0 %13
    %vm15 = vcmask 917248
    %16 = vst.msk [vmem:[#allocation0] sm:$0x1] %vm15, %v14
    %s17 = scalar_lea.vmem %s0, 5
    %v18 = vld [vmem:[%s17] sm:$0x1]
    %19 = vrot.lane.b32.xlu0 %v18, 80
    %v20 = vpop.permute.xlu0 %19
    %vm21 = vcmask 786048
    %22 = vst.msk [vmem:[#allocation0] sm:$0x1] %vm21, %v20
    %s23 = scalar_lea.vmem %s0, 4
    %v24 = vld [vmem:[%s23] sm:$0x1]
    %25 = vrot.lane.b32.xlu0 %v24, 64
    %v26 = vpop.permute.xlu0 %25
    %vm27 = vcmask 654848
    %28 = vst.msk [vmem:[#allocation0] sm:$0x1] %vm27, %v26
    %s29 = scalar_lea.vmem %s0, 3
    %v30 = vld [vmem:[%s29] sm:$0x1]
    %31 = vrot.lane.b32.xlu0 %v30, 48
    %v32 = vpop.permute.xlu0 %31
    %vm33 = vcmask 523648
    %34 = vst.msk [vmem:[#allocation0] sm:$0x1] %vm33, %v32
    %s35 = scalar_lea.vmem %s0, 2
    %v36 = vld [vmem:[%s35] sm:$0x1]
    %37 = vrot.lane.b32.xlu0 %v36, 32
    %v38 = vpop.permute.xlu0 %37
    %vm39 = vcmask 392448
    %40 = vst.msk [vmem:[#allocation0] sm:$0x1] %vm39, %v38
    %s41 = scalar_lea.vmem %s0, 1
    %v42 = vld [vmem:[%s41] sm:$0x1]
    %43 = vrot.lane.b32.xlu0 %v42, 16
    %v44 = vpop.permute.xlu0 %43
    %vm45 = vcmask 261248
    %46 = vst.msk [vmem:[#allocation0] sm:$0x1] %vm45, %v44
    %s48 = sshllo.u32 0, 1
    %v50 = vld [vmem:[#allocation0] sm:%s48]
    %s51 = sshllo.u32 0, 1
    %52 = vst [vmem:[%s1] sm:%s51] %v50

// kernel: autoencoder_forward.1
$region0: #{autoencoder_forward.1}
  #allocation0 [shape = 'u32[]', space=smem, size = 0x4, offset = 0x4, fixed_abs, tag = 'smem constant byte address 0x4 - core index']
  #allocation1 [shape = 'u32[144,128]{1,0:T(1,128)}', space=vmem, size = 0x12000, scoped, tag = 'internal scratch']
  %s0 = inlined_call_operand.vmem [shape: bf16[8,128], index: 0, kind: input, shape index: {}]
  %s1 = inlined_call_operand.vmem [shape: bf16[6,128,128], index: 1, kind: input, shape index: {}]
  %s2 = inlined_call_operand.vmem [shape: f32[6,1,128], index: 2, kind: input, shape index: {}]
  %s3 = inlined_call_operand.vmem [shape: f32[8,128], index: 3, kind: output, shape index: {}]
  %s4 = sld [smem:[#allocation0]]
  $region22: #{autoencoder_forward.1} parent=0
    _
  %s6 = ssub.s32 1, %s4
  %s7 = scalar_select 0, %s6, %s4
  // Predicated region
  $region2: #{autoencoder_forward.1} parent=0 // pred_check
    _
  $region3: #{autoencoder_forward.1} parent=0 // pred_check_branch
    %9 = sbr.rel (0) target = $region5
  $region4: #{autoencoder_forward.1} parent=0 // pred_region
    _
  $region5: #{autoencoder_forward.1} parent=0 // pred_fallthru
    _
  // Predicated region
  $region6: #{autoencoder_forward.1} parent=0 // pred_check
    _
  $region7: #{autoencoder_forward.1} parent=0 // pred_check_branch
    %11 = sbr.rel (0) target = $region9
  $region8: #{autoencoder_forward.1} parent=0 // pred_region
    _
  $region9: #{autoencoder_forward.1} parent=0 // pred_fallthru
    _
  // Predicated region
  $region10: #{autoencoder_forward.1} parent=0 // pred_check
    _
  $region11: #{autoencoder_forward.1} parent=0 // pred_check_branch
    %13 = sbr.rel (0) target = $region13
  $region12: #{autoencoder_forward.1} parent=0 // pred_region
    _
  $region13: #{autoencoder_forward.1} parent=0 // pred_fallthru
    _
  %v15 = vld [vmem:[%s0] sm:$0xf]
  %v16 = vld [vmem:[%s1] sm:$0xf]
  %v17 = vld [vmem:[%s1 + $0x4] sm:$0xf]
  %v18 = vld [vmem:[%s1 + $0x8] sm:$0xf]
  %v19 = vld [vmem:[%s1 + $0xc] sm:$0xf]
  %v20 = vld [vmem:[%s1 + $0x10] sm:$0xf]
  %v21 = vld [vmem:[%s1 + $0x14] sm:$0xf]
  %v22 = vld [vmem:[%s1 + $0x18] sm:$0xf]
  %v23 = vld [vmem:[%s1 + $0x1c] sm:$0xf]
  %v24 = vld [vmem:[%s1 + $0x20] sm:$0xf]
  %v25 = vld [vmem:[%s1 + $0x24] sm:$0xf]
  %v26 = vld [vmem:[%s1 + $0x28] sm:$0xf]
  %v27 = vld [vmem:[%s1 + $0x2c] sm:$0xf]
  %v28 = vld [vmem:[%s1 + $0x30] sm:$0xf]
  %v29 = vld [vmem:[%s1 + $0x34] sm:$0xf]
  %v30 = vld [vmem:[%s1 + $0x38] sm:$0xf]
  %v31 = vld [vmem:[%s1 + $0x3c] sm:$0xf]
  %v32 = vld [vmem:[%s2] sm:$0x1]
  %v34 = vlaneseq
  %v35 = vshrl.u32 %v34, 7
  %v36 = vsub.s32 0, %v35
  %v37 = vrot.slane %v32, %v36
  %v55 = vunpack.c.l.b16 %v16
  %v56 = vunpack.c.l.b16 %v17
  %v57 = vunpack.c.l.b16 %v18
  %v58 = vunpack.c.l.b16 %v19
  %v59 = vunpack.c.l.b16 %v20
  %v60 = vunpack.c.l.b16 %v21
  %v61 = vunpack.c.l.b16 %v22
  %v62 = vunpack.c.l.b16 %v23
  %v63 = vunpack.c.l.b16 %v24
  %v64 = vunpack.c.l.b16 %v25
  %v65 = vunpack.c.l.b16 %v26
  %v66 = vunpack.c.l.b16 %v27
  %v67 = vunpack.c.l.b16 %v28
  %v68 = vunpack.c.l.b16 %v29
  %v69 = vunpack.c.l.b16 %v30
  %v70 = vunpack.c.l.b16 %v31
  %v71 = vpack.c.b16 %v56, %v55
  %v72 = vpack.c.b16 %v58, %v57
  %v73 = vpack.c.b16 %v60, %v59
  %v74 = vpack.c.b16 %v62, %v61
  %v75 = vpack.c.b16 %v64, %v63
  %v76 = vpack.c.b16 %v66, %v65
  %v77 = vpack.c.b16 %v68, %v67
  %v78 = vpack.c.b16 %v70, %v69
  %87 = vmatprep.subr.bf16.mxu0 0
  %88 = vmatpush1.bf16.msra.mxu0 %v71
  %89 = vmatprep.subr.bf16.mxu0 0
  %90 = vmatpush1.bf16.msra.mxu0 %v72
  %91 = vmatprep.subr.bf16.mxu0 0
  %92 = vmatpush1.bf16.msra.mxu0 %v73
  %93 = vmatprep.subr.bf16.mxu0 0
  %94 = vmatpush1.bf16.msra.mxu0 %v74
  %95 = vmatprep.subr.bf16.mxu0 0
  %96 = vmatpush1.bf16.msra.mxu0 %v75
  %97 = vmatprep.subr.bf16.mxu0 0
  %98 = vmatpush1.bf16.msra.mxu0 %v76
  %99 = vmatprep.subr.bf16.mxu0 0
  %100 = vmatpush1.bf16.msra.mxu0 %v77
  %101 = vmatprep.subr.bf16.mxu0 0
  %102 = vmatpush1.bf16.msra.mxu0 %v78
  %103 = vmatprep.subr.bf16.mxu0 0
  %104 = vmatpush1.bf16.msra.mxu0 0
  %105 = vmatprep.subr.bf16.mxu0 0
  %106 = vmatpush1.bf16.msra.mxu0 0
  %107 = vmatprep.subr.bf16.mxu0 0
  %108 = vmatpush1.bf16.msra.mxu0 0
  %109 = vmatprep.subr.bf16.mxu0 0
  %110 = vmatpush1.bf16.msra.mxu0 0
  %111 = vmatprep.subr.bf16.mxu0 0
  %112 = vmatpush1.bf16.msra.mxu0 0
  %113 = vmatprep.subr.bf16.mxu0 0
  %114 = vmatpush1.bf16.msra.mxu0 0
  %115 = vmatprep.subr.bf16.mxu0 0
  %116 = vmatpush1.bf16.msra.mxu0 0
  %117 = vmatprep.subr.bf16.mxu0 0
  %118 = vmatpush1.bf16.msra.mxu0 0
  %119 = vmatprep.mubr.bf16.mxu0 0
  %120 = vmatmul.mubr.bf16.gmra.mrb[0].mxu0 %v15
  %v121 = vpop.f32.mrb[0].mxu0
  %v122 = vadd.f32 %v37, %v121
  %v123 = vpop.f32.mrb[0].mxu0
  %v124 = vpop.f32.mrb[0].mxu0
  %v125 = vpop.f32.mrb[0].mxu0
  %126 = vdwg.mxu0
  %v127 = vmax.f32 %v122, 0.0
  %v128 = vpack.c.bf16 %v127, %v127
  %s129 = scalar_lea.vmem %s1, 64
  %v130 = vld [vmem:[%s129] sm:$0xf]
  %v131 = vld [vmem:[%s129 + $0x4] sm:$0xf]
  %v132 = vld [vmem:[%s129 + $0x8] sm:$0xf]
  %v133 = vld [vmem:[%s129 + $0xc] sm:$0xf]
  %v134 = vld [vmem:[%s129 + $0x10] sm:$0xf]
  %v135 = vld [vmem:[%s129 + $0x14] sm:$0xf]
  %v136 = vld [vmem:[%s129 + $0x18] sm:$0xf]
  %v137 = vld [vmem:[%s129 + $0x1c] sm:$0xf]
  %v138 = vld [vmem:[%s129 + $0x20] sm:$0xf]
  %v139 = vld [vmem:[%s129 + $0x24] sm:$0xf]
  %v140 = vld [vmem:[%s129 + $0x28] sm:$0xf]
  %v141 = vld [vmem:[%s129 + $0x2c] sm:$0xf]
  %v142 = vld [vmem:[%s129 + $0x30] sm:$0xf]
  %v143 = vld [vmem:[%s129 + $0x34] sm:$0xf]
  %v144 = vld [vmem:[%s129 + $0x38] sm:$0xf]
  %v145 = vld [vmem:[%s129 + $0x3c] sm:$0xf]
  %s146 = scalar_lea.vmem %s2, 1
  %v147 = vld [vmem:[%s146] sm:$0x1]
  %v149 = vlaneseq
  %v150 = vshrl.u32 %v149, 7
  %v151 = vsub.s32 0, %v150
  %v152 = vrot.slane %v147, %v151
  %v170 = vunpack.c.l.b16 %v130
  %v171 = vunpack.c.l.b16 %v131
  %v172 = vunpack.c.l.b16 %v132
  %v173 = vunpack.c.l.b16 %v133
  %v174 = vunpack.c.l.b16 %v134
  %v175 = vunpack.c.l.b16 %v135
  %v176 = vunpack.c.l.b16 %v136
  %v177 = vunpack.c.l.b16 %v137
  %v178 = vunpack.c.l.b16 %v138
  %v179 = vunpack.c.l.b16 %v139
  %v180 = vunpack.c.l.b16 %v140
  %v181 = vunpack.c.l.b16 %v141
  %v182 = vunpack.c.l.b16 %v142
  %v183 = vunpack.c.l.b16 %v143
  %v184 = vunpack.c.l.b16 %v144
  %v185 = vunpack.c.l.b16 %v145
  %v186 = vpack.c.b16 %v171, %v170
  %v187 = vpack.c.b16 %v173, %v172
  %v188 = vpack.c.b16 %v175, %v174
  %v189 = vpack.c.b16 %v177, %v176
  %v190 = vpack.c.b16 %v179, %v178
  %v191 = vpack.c.b16 %v181, %v180
  %v192 = vpack.c.b16 %v183, %v182
  %v193 = vpack.c.b16 %v185, %v184
  %202 = vmatprep.subr.bf16.mxu0 0
  %203 = vmatpush1.bf16.msra.mxu0 %v186
  %204 = vmatprep.subr.bf16.mxu0 0
  %205 = vmatpush1.bf16.msra.mxu0 %v187
  %206 = vmatprep.subr.bf16.mxu0 0
  %207 = vmatpush1.bf16.msra.mxu0 %v188
  %208 = vmatprep.subr.bf16.mxu0 0
  %209 = vmatpush1.bf16.msra.mxu0 %v189
  %210 = vmatprep.subr.bf16.mxu0 0
  %211 = vmatpush1.bf16.msra.mxu0 %v190
  %212 = vmatprep.subr.bf16.mxu0 0
  %213 = vmatpush1.bf16.msra.mxu0 %v191
  %214 = vmatprep.subr.bf16.mxu0 0
  %215 = vmatpush1.bf16.msra.mxu0 %v192
  %216 = vmatprep.subr.bf16.mxu0 0
  %217 = vmatpush1.bf16.msra.mxu0 %v193
  %218 = vmatprep.subr.bf16.mxu0 0
  %219 = vmatpush1.bf16.msra.mxu0 0
  %220 = vmatprep.subr.bf16.mxu0 0
  %221 = vmatpush1.bf16.msra.mxu0 0
  %222 = vmatprep.subr.bf16.mxu0 0
  %223 = vmatpush1.bf16.msra.mxu0 0
  %224 = vmatprep.subr.bf16.mxu0 0
  %225 = vmatpush1.bf16.msra.mxu0 0
  %226 = vmatprep.subr.bf16.mxu0 0
  %227 = vmatpush1.bf16.msra.mxu0 0
  %228 = vmatprep.subr.bf16.mxu0 0
  %229 = vmatpush1.bf16.msra.mxu0 0
  %230 = vmatprep.subr.bf16.mxu0 0
  %231 = vmatpush1.bf16.msra.mxu0 0
  %232 = vmatprep.subr.bf16.mxu0 0
  %233 = vmatpush1.bf16.msra.mxu0 0
  %234 = vmatprep.mubr.bf16.mxu0 0
  %235 = vmatmul.mubr.bf16.gmra.mrb[0].mxu0 %v128
  %v236 = vpop.f32.mrb[0].mxu0
  %v237 = vadd.f32 %v152, %v236
  %v238 = vpop.f32.mrb[0].mxu0
  %v239 = vpop.f32.mrb[0].mxu0
  %v240 = vpop.f32.mrb[0].mxu0
  %241 = vdwg.mxu0
  %v242 = vmax.f32 %v237, 0.0
  %v243 = vpack.c.bf16 %v242, %v242
  %s244 = scalar_lea.vmem %s1, 128
  %v245 = vld [vmem:[%s244] sm:$0xf]
  %v246 = vld [vmem:[%s244 + $0x4] sm:$0xf]
  %v247 = vld [vmem:[%s244 + $0x8] sm:$0xf]
  %v248 = vld [vmem:[%s244 + $0xc] sm:$0xf]
  %v249 = vld [vmem:[%s244 + $0x10] sm:$0xf]
  %v250 = vld [vmem:[%s244 + $0x14] sm:$0xf]
  %v251 = vld [vmem:[%s244 + $0x18] sm:$0xf]
  %v252 = vld [vmem:[%s244 + $0x1c] sm:$0xf]
  %v253 = vld [vmem:[%s244 + $0x20] sm:$0xf]
  %v254 = vld [vmem:[%s244 + $0x24] sm:$0xf]
  %v255 = vld [vmem:[%s244 + $0x28] sm:$0xf]
  %v256 = vld [vmem:[%s244 + $0x2c] sm:$0xf]
  %v257 = vld [vmem:[%s244 + $0x30] sm:$0xf]
  %v258 = vld [vmem:[%s244 + $0x34] sm:$0xf]
  %v259 = vld [vmem:[%s244 + $0x38] sm:$0xf]
  %v260 = vld [vmem:[%s244 + $0x3c] sm:$0xf]
  %s261 = scalar_lea.vmem %s2, 2
  %v262 = vld [vmem:[%s261] sm:$0x1]
  %v264 = vlaneseq
  %v265 = vshrl.u32 %v264, 7
  %v266 = vsub.s32 0, %v265
  %v267 = vrot.slane %v262, %v266
  %v285 = vunpack.c.l.b16 %v245
  %v286 = vunpack.c.l.b16 %v246
  %v287 = vunpack.c.l.b16 %v247
  %v288 = vunpack.c.l.b16 %v248
  %v289 = vunpack.c.l.b16 %v249
  %v290 = vunpack.c.l.b16 %v250
  %v291 = vunpack.c.l.b16 %v251
  %v292 = vunpack.c.l.b16 %v252
  %v293 = vunpack.c.l.b16 %v253
  %v294 = vunpack.c.l.b16 %v254
  %v295 = vunpack.c.l.b16 %v255
  %v296 = vunpack.c.l.b16 %v256
  %v297 = vunpack.c.l.b16 %v257
  %v298 = vunpack.c.l.b16 %v258
  %v299 = vunpack.c.l.b16 %v259
  %v300 = vunpack.c.l.b16 %v260
  %v301 = vpack.c.b16 %v286, %v285
  %v302 = vpack.c.b16 %v288, %v287
  %v303 = vpack.c.b16 %v290, %v289
  %v304 = vpack.c.b16 %v292, %v291
  %v305 = vpack.c.b16 %v294, %v293
  %v306 = vpack.c.b16 %v296, %v295
  %v307 = vpack.c.b16 %v298, %v297
  %v308 = vpack.c.b16 %v300, %v299
  %317 = vmatprep.subr.bf16.mxu0 0
  %318 = vmatpush1.bf16.msra.mxu0 %v301
  %319 = vmatprep.subr.bf16.mxu0 0
  %320 = vmatpush1.bf16.msra.mxu0 %v302
  %321 = vmatprep.subr.bf16.mxu0 0
  %322 = vmatpush1.bf16.msra.mxu0 %v303
  %323 = vmatprep.subr.bf16.mxu0 0
  %324 = vmatpush1.bf16.msra.mxu0 %v304
  %325 = vmatprep.subr.bf16.mxu0 0
  %326 = vmatpush1.bf16.msra.mxu0 %v305
  %327 = vmatprep.subr.bf16.mxu0 0
  %328 = vmatpush1.bf16.msra.mxu0 %v306
  %329 = vmatprep.subr.bf16.mxu0 0
  %330 = vmatpush1.bf16.msra.mxu0 %v307
  %331 = vmatprep.subr.bf16.mxu0 0
  %332 = vmatpush1.bf16.msra.mxu0 %v308
  %333 = vmatprep.subr.bf16.mxu0 0
  %334 = vmatpush1.bf16.msra.mxu0 0
  %335 = vmatprep.subr.bf16.mxu0 0
  %336 = vmatpush1.bf16.msra.mxu0 0
  %337 = vmatprep.subr.bf16.mxu0 0
  %338 = vmatpush1.bf16.msra.mxu0 0
  %339 = vmatprep.subr.bf16.mxu0 0
  %340 = vmatpush1.bf16.msra.mxu0 0
  %341 = vmatprep.subr.bf16.mxu0 0
  %342 = vmatpush1.bf16.msra.mxu0 0
  %343 = vmatprep.subr.bf16.mxu0 0
  %344 = vmatpush1.bf16.msra.mxu0 0
  %345 = vmatprep.subr.bf16.mxu0 0
  %346 = vmatpush1.bf16.msra.mxu0 0
  %347 = vmatprep.subr.bf16.mxu0 0
  %348 = vmatpush1.bf16.msra.mxu0 0
  %349 = vmatprep.mubr.bf16.mxu0 0
  %350 = vmatmul.mubr.bf16.gmra.mrb[0].mxu0 %v243
  %v351 = vpop.f32.mrb[0].mxu0
  %v352 = vadd.f32 %v267, %v351
  %v353 = vpop.f32.mrb[0].mxu0
  %v354 = vpop.f32.mrb[0].mxu0
  %v355 = vpop.f32.mrb[0].mxu0
  %356 = vdwg.mxu0
  %v357 = vpack.c.bf16 %v352, %v352
  %s358 = scalar_lea.vmem %s1, 192
  %v359 = vld [vmem:[%s358] sm:$0xf]
  %v360 = vld [vmem:[%s358 + $0x4] sm:$0xf]
  %v361 = vld [vmem:[%s358 + $0x8] sm:$0xf]
  %v362 = vld [vmem:[%s358 + $0xc] sm:$0xf]
  %v363 = vld [vmem:[%s358 + $0x10] sm:$0xf]
  %v364 = vld [vmem:[%s358 + $0x14] sm:$0xf]
  %v365 = vld [vmem:[%s358 + $0x18] sm:$0xf]
  %v366 = vld [vmem:[%s358 + $0x1c] sm:$0xf]
  %v367 = vld [vmem:[%s358 + $0x20] sm:$0xf]
  %v368 = vld [vmem:[%s358 + $0x24] sm:$0xf]
  %v369 = vld [vmem:[%s358 + $0x28] sm:$0xf]
  %v370 = vld [vmem:[%s358 + $0x2c] sm:$0xf]
  %v371 = vld [vmem:[%s358 + $0x30] sm:$0xf]
  %v372 = vld [vmem:[%s358 + $0x34] sm:$0xf]
  %v373 = vld [vmem:[%s358 + $0x38] sm:$0xf]
  %v374 = vld [vmem:[%s358 + $0x3c] sm:$0xf]
  %s375 = scalar_lea.vmem %s2, 3
  %v376 = vld [vmem:[%s375] sm:$0x1]
  %v378 = vlaneseq
  %v379 = vshrl.u32 %v378, 7
  %v380 = vsub.s32 0, %v379
  %v381 = vrot.slane %v376, %v380
  %v399 = vunpack.c.l.b16 %v359
  %v400 = vunpack.c.l.b16 %v360
  %v401 = vunpack.c.l.b16 %v361
  %v402 = vunpack.c.l.b16 %v362
  %v403 = vunpack.c.l.b16 %v363
  %v404 = vunpack.c.l.b16 %v364
  %v405 = vunpack.c.l.b16 %v365
  %v406 = vunpack.c.l.b16 %v366
  %v407 = vunpack.c.l.b16 %v367
  %v408 = vunpack.c.l.b16 %v368
  %v409 = vunpack.c.l.b16 %v369
  %v410 = vunpack.c.l.b16 %v370
  %v411 = vunpack.c.l.b16 %v371
  %v412 = vunpack.c.l.b16 %v372
  %v413 = vunpack.c.l.b16 %v373
  %v414 = vunpack.c.l.b16 %v374
  %v415 = vpack.c.b16 %v400, %v399
  %v416 = vpack.c.b16 %v402, %v401
  %v417 = vpack.c.b16 %v404, %v403
  %v418 = vpack.c.b16 %v406, %v405
  %v419 = vpack.c.b16 %v408, %v407
  %v420 = vpack.c.b16 %v410, %v409
  %v421 = vpack.c.b16 %v412, %v411
  %v422 = vpack.c.b16 %v414, %v413
  %431 = vmatprep.subr.bf16.mxu0 0
  %432 = vmatpush1.bf16.msra.mxu0 %v415
  %433 = vmatprep.subr.bf16.mxu0 0
  %434 = vmatpush1.bf16.msra.mxu0 %v416
  %435 = vmatprep.subr.bf16.mxu0 0
  %436 = vmatpush1.bf16.msra.mxu0 %v417
  %437 = vmatprep.subr.bf16.mxu0 0
  %438 = vmatpush1.bf16.msra.mxu0 %v418
  %439 = vmatprep.subr.bf16.mxu0 0
  %440 = vmatpush1.bf16.msra.mxu0 %v419
  %441 = vmatprep.subr.bf16.mxu0 0
  %442 = vmatpush1.bf16.msra.mxu0 %v420
  %443 = vmatprep.subr.bf16.mxu0 0
  %444 = vmatpush1.bf16.msra.mxu0 %v421
  %445 = vmatprep.subr.bf16.mxu0 0
  %446 = vmatpush1.bf16.msra.mxu0 %v422
  %447 = vmatprep.subr.bf16.mxu0 0
  %448 = vmatpush1.bf16.msra.mxu0 0
  %449 = vmatprep.subr.bf16.mxu0 0
  %450 = vmatpush1.bf16.msra.mxu0 0
  %451 = vmatprep.subr.bf16.mxu0 0
  %452 = vmatpush1.bf16.msra.mxu0 0
  %453 = vmatprep.subr.bf16.mxu0 0
  %454 = vmatpush1.bf16.msra.mxu0 0
  %455 = vmatprep.subr.bf16.mxu0 0
  %456 = vmatpush1.bf16.msra.mxu0 0
  %457 = vmatprep.subr.bf16.mxu0 0
  %458 = vmatpush1.bf16.msra.mxu0 0
  %459 = vmatprep.subr.bf16.mxu0 0
  %460 = vmatpush1.bf16.msra.mxu0 0
  %461 = vmatprep.subr.bf16.mxu0 0
  %462 = vmatpush1.bf16.msra.mxu0 0
  %463 = vmatprep.mubr.bf16.mxu0 0
  %464 = vmatmul.mubr.bf16.gmra.mrb[0].mxu0 %v357
  %v465 = vpop.f32.mrb[0].mxu0
  %v466 = vadd.f32 %v381, %v465
  %v467 = vpop.f32.mrb[0].mxu0
  %v468 = vpop.f32.mrb[0].mxu0
  %v469 = vpop.f32.mrb[0].mxu0
  %470 = vdwg.mxu0
  %v471 = vmax.f32 %v466, 0.0
  %v472 = vpack.c.bf16 %v471, %v471
  %s473 = scalar_lea.vmem %s1, 256
  %v474 = vld [vmem:[%s473] sm:$0xf]
  %v475 = vld [vmem:[%s473 + $0x4] sm:$0xf]
  %v476 = vld [vmem:[%s473 + $0x8] sm:$0xf]
  %v477 = vld [vmem:[%s473 + $0xc] sm:$0xf]
  %v478 = vld [vmem:[%s473 + $0x10] sm:$0xf]
  %v479 = vld [vmem:[%s473 + $0x14] sm:$0xf]
  %v480 = vld [vmem:[%s473 + $0x18] sm:$0xf]
  %v481 = vld [vmem:[%s473 + $0x1c] sm:$0xf]
  %v482 = vld [vmem:[%s473 + $0x20] sm:$0xf]
  %v483 = vld [vmem:[%s473 + $0x24] sm:$0xf]
  %v484 = vld [vmem:[%s473 + $0x28] sm:$0xf]
  %v485 = vld [vmem:[%s473 + $0x2c] sm:$0xf]
  %v486 = vld [vmem:[%s473 + $0x30] sm:$0xf]
  %v487 = vld [vmem:[%s473 + $0x34] sm:$0xf]
  %v488 = vld [vmem:[%s473 + $0x38] sm:$0xf]
  %v489 = vld [vmem:[%s473 + $0x3c] sm:$0xf]
  %s490 = scalar_lea.vmem %s2, 4
  %v491 = vld [vmem:[%s490] sm:$0x1]
  %v493 = vlaneseq
  %v494 = vshrl.u32 %v493, 7
  %v495 = vsub.s32 0, %v494
  %v496 = vrot.slane %v491, %v495
  %v514 = vunpack.c.l.b16 %v474
  %v515 = vunpack.c.l.b16 %v475
  %v516 = vunpack.c.l.b16 %v476
  %v517 = vunpack.c.l.b16 %v477
  %v518 = vunpack.c.l.b16 %v478
  %v519 = vunpack.c.l.b16 %v479
  %v520 = vunpack.c.l.b16 %v480
  %v521 = vunpack.c.l.b16 %v481
  %v522 = vunpack.c.l.b16 %v482
  %v523 = vunpack.c.l.b16 %v483
  %v524 = vunpack.c.l.b16 %v484
  %v525 = vunpack.c.l.b16 %v485
  %v526 = vunpack.c.l.b16 %v486
  %v527 = vunpack.c.l.b16 %v487
  %v528 = vunpack.c.l.b16 %v488
  %v529 = vunpack.c.l.b16 %v489
  %v530 = vpack.c.b16 %v515, %v514
  %v531 = vpack.c.b16 %v517, %v516
  %v532 = vpack.c.b16 %v519, %v518
  %v533 = vpack.c.b16 %v521, %v520
  %v534 = vpack.c.b16 %v523, %v522
  %v535 = vpack.c.b16 %v525, %v524
  %v536 = vpack.c.b16 %v527, %v526
  %v537 = vpack.c.b16 %v529, %v528
  %546 = vmatprep.subr.bf16.mxu0 0
  %547 = vmatpush1.bf16.msra.mxu0 %v530
  %548 = vmatprep.subr.bf16.mxu0 0
  %549 = vmatpush1.bf16.msra.mxu0 %v531
  %550 = vmatprep.subr.bf16.mxu0 0
  %551 = vmatpush1.bf16.msra.mxu0 %v532
  %552 = vmatprep.subr.bf16.mxu0 0
  %553 = vmatpush1.bf16.msra.mxu0 %v533
  %554 = vmatprep.subr.bf16.mxu0 0
  %555 = vmatpush1.bf16.msra.mxu0 %v534
  %556 = vmatprep.subr.bf16.mxu0 0
  %557 = vmatpush1.bf16.msra.mxu0 %v535
  %558 = vmatprep.subr.bf16.mxu0 0
  %559 = vmatpush1.bf16.msra.mxu0 %v536
  %560 = vmatprep.subr.bf16.mxu0 0
  %561 = vmatpush1.bf16.msra.mxu0 %v537
  %562 = vmatprep.subr.bf16.mxu0 0
  %563 = vmatpush1.bf16.msra.mxu0 0
  %564 = vmatprep.subr.bf16.mxu0 0
  %565 = vmatpush1.bf16.msra.mxu0 0
  %566 = vmatprep.subr.bf16.mxu0 0
  %567 = vmatpush1.bf16.msra.mxu0 0
  %568 = vmatprep.subr.bf16.mxu0 0
  %569 = vmatpush1.bf16.msra.mxu0 0
  %570 = vmatprep.subr.bf16.mxu0 0
  %571 = vmatpush1.bf16.msra.mxu0 0
  %572 = vmatprep.subr.bf16.mxu0 0
  %573 = vmatpush1.bf16.msra.mxu0 0
  %574 = vmatprep.subr.bf16.mxu0 0
  %575 = vmatpush1.bf16.msra.mxu0 0
  %576 = vmatprep.subr.bf16.mxu0 0
  %577 = vmatpush1.bf16.msra.mxu0 0
  %578 = vmatprep.mubr.bf16.mxu0 0
  %579 = vmatmul.mubr.bf16.gmra.mrb[0].mxu0 %v472
  %v580 = vpop.f32.mrb[0].mxu0
  %v581 = vadd.f32 %v496, %v580
  %v582 = vpop.f32.mrb[0].mxu0
  %v583 = vpop.f32.mrb[0].mxu0
  %v584 = vpop.f32.mrb[0].mxu0
  %585 = vdwg.mxu0
  %v586 = vmax.f32 %v581, 0.0
  %v587 = vpack.c.bf16 %v586, %v586
  %s588 = scalar_lea.vmem %s1, 320
  %v589 = vld [vmem:[%s588] sm:$0xf]
  %v590 = vld [vmem:[%s588 + $0x4] sm:$0xf]
  %v591 = vld [vmem:[%s588 + $0x8] sm:$0xf]
  %v592 = vld [vmem:[%s588 + $0xc] sm:$0xf]
  %v593 = vld [vmem:[%s588 + $0x10] sm:$0xf]
  %v594 = vld [vmem:[%s588 + $0x14] sm:$0xf]
  %v595 = vld [vmem:[%s588 + $0x18] sm:$0xf]
  %v596 = vld [vmem:[%s588 + $0x1c] sm:$0xf]
  %v597 = vld [vmem:[%s588 + $0x20] sm:$0xf]
  %v598 = vld [vmem:[%s588 + $0x24] sm:$0xf]
  %v599 = vld [vmem:[%s588 + $0x28] sm:$0xf]
  %v600 = vld [vmem:[%s588 + $0x2c] sm:$0xf]
  %v601 = vld [vmem:[%s588 + $0x30] sm:$0xf]
  %v602 = vld [vmem:[%s588 + $0x34] sm:$0xf]
  %v603 = vld [vmem:[%s588 + $0x38] sm:$0xf]
  %v604 = vld [vmem:[%s588 + $0x3c] sm:$0xf]
  %s605 = scalar_lea.vmem %s2, 5
  %v606 = vld [vmem:[%s605] sm:$0x1]
  %v608 = vlaneseq
  %v609 = vshrl.u32 %v608, 7
  %v610 = vsub.s32 0, %v609
  %v611 = vrot.slane %v606, %v610
  %v629 = vunpack.c.l.b16 %v589
  %v630 = vunpack.c.l.b16 %v590
  %v631 = vunpack.c.l.b16 %v591
  %v632 = vunpack.c.l.b16 %v592
  %v633 = vunpack.c.l.b16 %v593
  %v634 = vunpack.c.l.b16 %v594
  %v635 = vunpack.c.l.b16 %v595
  %v636 = vunpack.c.l.b16 %v596
  %v637 = vunpack.c.l.b16 %v597
  %v638 = vunpack.c.l.b16 %v598
  %v639 = vunpack.c.l.b16 %v599
  %v640 = vunpack.c.l.b16 %v600
  %v641 = vunpack.c.l.b16 %v601
  %v642 = vunpack.c.l.b16 %v602
  %v643 = vunpack.c.l.b16 %v603
  %v644 = vunpack.c.l.b16 %v604
  %v645 = vpack.c.b16 %v630, %v629
  %v646 = vpack.c.b16 %v632, %v631
  %v647 = vpack.c.b16 %v634, %v633
  %v648 = vpack.c.b16 %v636, %v635
  %v649 = vpack.c.b16 %v638, %v637
  %v650 = vpack.c.b16 %v640, %v639
  %v651 = vpack.c.b16 %v642, %v641
  %v652 = vpack.c.b16 %v644, %v643
  %661 = vmatprep.subr.bf16.mxu0 0
  %662 = vmatpush1.bf16.msra.mxu0 %v645
  %663 = vmatprep.subr.bf16.mxu0 0
  %664 = vmatpush1.bf16.msra.mxu0 %v646
  %665 = vmatprep.subr.bf16.mxu0 0
  %666 = vmatpush1.bf16.msra.mxu0 %v647
  %667 = vmatprep.subr.bf16.mxu0 0
  %668 = vmatpush1.bf16.msra.mxu0 %v648
  %669 = vmatprep.subr.bf16.mxu0 0
  %670 = vmatpush1.bf16.msra.mxu0 %v649
  %671 = vmatprep.subr.bf16.mxu0 0
  %672 = vmatpush1.bf16.msra.mxu0 %v650
  %673 = vmatprep.subr.bf16.mxu0 0
  %674 = vmatpush1.bf16.msra.mxu0 %v651
  %675 = vmatprep.subr.bf16.mxu0 0
  %676 = vmatpush1.bf16.msra.mxu0 %v652
  %677 = vmatprep.subr.bf16.mxu0 0
  %678 = vmatpush1.bf16.msra.mxu0 0
  %679 = vmatprep.subr.bf16.mxu0 0
  %680 = vmatpush1.bf16.msra.mxu0 0
  %681 = vmatprep.subr.bf16.mxu0 0
  %682 = vmatpush1.bf16.msra.mxu0 0
  %683 = vmatprep.subr.bf16.mxu0 0
  %684 = vmatpush1.bf16.msra.mxu0 0
  %685 = vmatprep.subr.bf16.mxu0 0
  %686 = vmatpush1.bf16.msra.mxu0 0
  %687 = vmatprep.subr.bf16.mxu0 0
  %688 = vmatpush1.bf16.msra.mxu0 0
  %689 = vmatprep.subr.bf16.mxu0 0
  %690 = vmatpush1.bf16.msra.mxu0 0
  %691 = vmatprep.subr.bf16.mxu0 0
  %692 = vmatpush1.bf16.msra.mxu0 0
  %693 = vmatprep.mubr.bf16.mxu0 0
  %694 = vmatmul.mubr.bf16.gmra.mrb[0].mxu0 %v587
  %v695 = vpop.f32.mrb[0].mxu0
  %v696 = vadd.f32 %v611, %v695
  %v697 = vpop.f32.mrb[0].mxu0
  %v698 = vpop.f32.mrb[0].mxu0
  %v699 = vpop.f32.mrb[0].mxu0
  %700 = vdwg.mxu0
  %701 = vst [vmem:[%s3] sm:$0xff] %v696
  // Predicated region
  $region14: #{autoencoder_forward.1} parent=0 // pred_check
    _
  $region15: #{autoencoder_forward.1} parent=0 // pred_check_branch
    %703 = sbr.rel (0) target = $region17
  $region16: #{autoencoder_forward.1} parent=0 // pred_region
    _
  $region17: #{autoencoder_forward.1} parent=0 // pred_fallthru
    _
  // Predicated region
  $region18: #{autoencoder_forward.1} parent=0 // pred_check
    _
  $region19: #{autoencoder_forward.1} parent=0 // pred_check_branch
    %705 = sbr.rel (0) target = $region21
  $region20: #{autoencoder_forward.1} parent=0 // pred_region
    _
  $region21: #{autoencoder_forward.1} parent=0 // pred_fallthru
    _

</llo_original>
